<compile_context>
chip_gen: v7x
topology: tpu7x:2x2x1
jax: 0.10.0
libtpu: 0.0.40
codegen_flags: <defaults>
</compile_context>

<pallas_src>
import functools

import jax
import jax.numpy as jnp
from jax import lax
from jax.experimental import pallas as pl
from jax.experimental.pallas import tpu as pltpu


def _pos_encoding_kernel(ids_ref, pos_ref, embed_hbm, *rest,
                         nb, seq_len, vocab, dropout_rate, apply_dropout):
    """One grid step: gather nb*seq_len embedding rows, add positions, dropout.

    ids_ref:   (B*L,)      int32  SMEM (scalar prefetch)
    pos_ref:   (L, D)      f32    VMEM block (rows 0..L-1 of position table)
    embed_hbm: (V, D)      f32    HBM ref (no auto-DMA)
    rand_ref:  (nb, L, D)  f32    VMEM block (only present when dropout active)
    out_ref:   (nb, L, D)  f32    VMEM block
    gather:    (nb*L, D)   f32    VMEM scratch for the gathered embedding rows
    sems:      (nb*L,)     DMA semaphores (one per in-flight row DMA)
    """
    if apply_dropout:
        rand_ref, out_ref, gather, sems = rest
    else:
        out_ref, gather, sems = rest

    rows = nb * seq_len
    base = pl.program_id(0) * rows

    # Issue all row-gather DMAs (HBM -> VMEM); the gather lives on the DMA engine.
    def _issue(r, carry):
        tok = ids_ref[base + r]
        tok = jnp.clip(tok, 0, vocab - 1)   # guard bad ids: never OOB-DMA
        pltpu.make_async_copy(embed_hbm.at[tok], gather.at[r], sems.at[r]).start()
        return carry

    lax.fori_loop(0, rows, _issue, 0)

    # Wait for all of them.
    def _wait(r, carry):
        pltpu.make_async_copy(embed_hbm.at[0], gather.at[r], sems.at[r]).wait()
        return carry

    lax.fori_loop(0, rows, _wait, 0)

    d_model = out_ref.shape[-1]
    tok_rows = gather[...].reshape(nb, seq_len, d_model)     # (nb, L, D)
    y = tok_rows + pos_ref[...][None, :, :]                  # broadcast pos rows

    if apply_dropout:
        keep = rand_ref[...] >= dropout_rate                 # P(keep) = 1 - p
        y = jnp.where(keep, y * (1.0 / (1.0 - dropout_rate)), 0.0)

    out_ref[...] = y.astype(out_ref.dtype)


def position_encoding(ids, embed_w, pos_w, *, dropout_rate=0.1, train=True,
                      seed=0, rows_per_step=256):
    """Pallas equivalent of PositionEncoding.forward.

    ids:     (B, L) int32 token ids
    embed_w: (vocab_size, d_model) float32 token-embedding table
    pos_w:   (max_length, d_model) float32 position-embedding table
    returns  (B, L, d_model) float32
    """
    b, l = ids.shape
    vocab, d_model = embed_w.shape
    max_length = pos_w.shape[0]
    assert l <= max_length
    assert d_model % 128 == 0, "d_model must be lane-aligned (multiple of 128)"
    assert l % 8 == 0, "sequence length must be sublane-aligned (multiple of 8)"

    # Batch elements per grid step: amortize per-step overhead with big tiles.
    cap = max(1, rows_per_step // l)
    nb = 1
    for cand in range(min(b, cap), 0, -1):
        if b % cand == 0:
            nb = cand
            break
    rows = nb * l
    num_steps = b // nb

    ids_flat = ids.astype(jnp.int32).reshape(-1)
    apply_dropout = bool(train) and float(dropout_rate) > 0.0

    kernel = functools.partial(
        _pos_encoding_kernel,
        nb=nb, seq_len=l, vocab=vocab,
        dropout_rate=float(dropout_rate), apply_dropout=apply_dropout)

    in_specs = [
        # first L rows of the (small) position table, constant across the grid
        pl.BlockSpec((l, d_model), lambda t, ids: (0, 0)),
        # full token-embedding table stays in HBM; gathered manually by DMA
        pl.BlockSpec(memory_space=pl.ANY),
    ]
    inputs = [pos_w, embed_w]
    if apply_dropout:
        rand = jax.random.uniform(jax.random.PRNGKey(seed), (b, l, d_model),
                                  dtype=jnp.float32)
        in_specs.append(pl.BlockSpec((nb, l, d_model), lambda t, ids: (t, 0, 0)))
        inputs.append(rand)

    return pl.pallas_call(
        kernel,
        out_shape=jax.ShapeDtypeStruct((b, l, d_model), jnp.float32),
        grid_spec=pltpu.PrefetchScalarGridSpec(
            num_scalar_prefetch=1,                 # token ids -> SMEM
            grid=(num_steps,),
            in_specs=in_specs,
            out_specs=pl.BlockSpec((nb, l, d_model), lambda t, ids: (t, 0, 0)),
            scratch_shapes=[
                pltpu.VMEM((rows, d_model), jnp.float32),   # gathered rows
                pltpu.SemaphoreType.DMA((rows,)),           # one sem per row DMA
            ]),
        compiler_params=pltpu.CompilerParams(
            dimension_semantics=("parallel",)),    # shard batch tiles over TCs
    )(ids_flat, *inputs)


if __name__ == "__main__":
    # Small, deterministic config (d_model lane-aligned, seq sublane-aligned).
    B, L = 2, 16
    D_MODEL = 128
    VOCAB = 256
    MAX_LEN = 32
    DROPOUT = 0.1
    SEED = 1234

    key = jax.random.PRNGKey(0)
    k_ids, k_emb, k_pos = jax.random.split(key, 3)

    ids = jax.random.randint(k_ids, (B, L), 0, VOCAB, dtype=jnp.int32)
    embed_w = jax.random.normal(k_emb, (VOCAB, D_MODEL), dtype=jnp.float32)
    pos_w = jax.random.normal(k_pos, (MAX_LEN, D_MODEL), dtype=jnp.float32)

    ref = embed_w[ids] + pos_w[:L][None, :, :]

    # Eval mode (dropout disabled): exact match with pure-JAX reference.
    out_eval = jax.block_until_ready(
        position_encoding(ids, embed_w, pos_w, dropout_rate=DROPOUT, train=False))
    assert out_eval.shape == (B, L, D_MODEL)
    assert jnp.allclose(out_eval, ref, atol=1e-5, rtol=1e-5)

    # Training mode (inverted dropout with deterministic host-side randomness).
    out_train = jax.block_until_ready(
        position_encoding(ids, embed_w, pos_w, dropout_rate=DROPOUT,
                          train=True, seed=SEED))
    rand = jax.random.uniform(jax.random.PRNGKey(SEED), (B, L, D_MODEL),
                              dtype=jnp.float32)
    keep = rand >= DROPOUT
    expected = jnp.where(keep, ref / (1.0 - DROPOUT), 0.0)
    assert out_train.shape == (B, L, D_MODEL)
    assert jnp.allclose(out_train, expected, atol=1e-5, rtol=1e-5)

    print("KERNEL_OK")
</pallas_src>

<mosaic_0001>
module attributes {stable_mosaic.version = 11 : i64} {
  func.func @_pos_encoding_kernel(%arg0: i32, %arg1: memref<32xi32, #tpu.memory_space<smem>>, %arg2: memref<16x128xf32, #tpu.memory_space<vmem>>, %arg3: memref<256x128xf32, #tpu.memory_space<any>>, %arg4: memref<2x16x128xf32, #tpu.memory_space<vmem>>, %arg5: memref<32x128xf32, #tpu.memory_space<vmem>>, %arg6: memref<32x!tpu.dma_semaphore, #tpu.memory_space<semaphore_mem>>) attributes {dimension_semantics = [#tpu.dimension_semantics<parallel>], iteration_bounds = array<i64: 1>, scalar_prefetch = 1 : i64, scratch_operands = 2 : i64, tpu.core_type = #tpu.core_type<tc>, window_params = [{transform_indices = @transform_0, window_bounds = array<i64: 16, 128>}, {}, {transform_indices = @transform_2, window_bounds = array<i64: 2, 16, 128>}]} {
    %c32_i32 = arith.constant 32 : i32
    %0 = arith.muli %arg0, %c32_i32 : i32
    %c0_i32 = arith.constant 0 : i32
    %c32_i32_0 = arith.constant 32 : i32
    %1 = arith.addi %c0_i32, %c32_i32_0 : i32
    %c1_i32 = arith.constant 1 : i32
    scf.for %arg7 = %c0_i32 to %1 step %c1_i32  : i32 {
      %10 = arith.addi %0, %arg7 : i32
      %11 = arith.index_cast %10 : i32 to index
      %12 = memref.load %arg1[%11] : memref<32xi32, #tpu.memory_space<smem>>
      %c0_i32_12 = arith.constant 0 : i32
      %c255_i32 = arith.constant 255 : i32
      %13 = arith.maxsi %c0_i32_12, %12 : i32
      %14 = arith.minsi %c255_i32, %13 : i32
      %c0_i32_13 = arith.constant 0 : i32
      %15 = tpu.memref_slice %arg3[%14, %c0_i32_13] : memref<256x128xf32, #tpu.memory_space<any>> -> memref<1x128xf32, #tpu.memory_space<any>>
      %16 = tpu.memref_squeeze %15 : memref<1x128xf32, #tpu.memory_space<any>> -> memref<128xf32, #tpu.memory_space<any>>
      %c0_i32_14 = arith.constant 0 : i32
      %17 = tpu.memref_slice %arg5[%arg7, %c0_i32_14] : memref<32x128xf32, #tpu.memory_space<vmem>> -> memref<1x128xf32, #tpu.memory_space<vmem>>
      %18 = tpu.memref_squeeze %17 : memref<1x128xf32, #tpu.memory_space<vmem>> -> memref<128xf32, #tpu.memory_space<vmem>>
      %19 = tpu.memref_slice %arg6[%arg7] : memref<32x!tpu.dma_semaphore, #tpu.memory_space<semaphore_mem>> -> memref<1x!tpu.dma_semaphore, #tpu.memory_space<semaphore_mem>>
      %20 = tpu.memref_squeeze %19 : memref<1x!tpu.dma_semaphore, #tpu.memory_space<semaphore_mem>> -> memref<!tpu.dma_semaphore, #tpu.memory_space<semaphore_mem>>
      tpu.enqueue_dma source(%16 : memref<128xf32, #tpu.memory_space<any>>) target(%18 : memref<128xf32, #tpu.memory_space<vmem>>) target_semaphore(%20 : memref<!tpu.dma_semaphore, #tpu.memory_space<semaphore_mem>>)
    }
    %c32_i32_1 = arith.constant 32 : i32
    %c0_i32_2 = arith.constant 0 : i32
    %c32_i32_3 = arith.constant 32 : i32
    %2 = arith.addi %c0_i32_2, %c32_i32_3 : i32
    %c1_i32_4 = arith.constant 1 : i32
    scf.for %arg7 = %c0_i32_2 to %2 step %c1_i32_4  : i32 {
      %c0_i32_12 = arith.constant 0 : i32
      %c0_i32_13 = arith.constant 0 : i32
      %10 = tpu.memref_slice %arg3[%c0_i32_12, %c0_i32_13] : memref<256x128xf32, #tpu.memory_space<any>> -> memref<1x128xf32, #tpu.memory_space<any>>
      %11 = tpu.memref_squeeze %10 : memref<1x128xf32, #tpu.memory_space<any>> -> memref<128xf32, #tpu.memory_space<any>>
      %c0_i32_14 = arith.constant 0 : i32
      %12 = tpu.memref_slice %arg5[%arg7, %c0_i32_14] : memref<32x128xf32, #tpu.memory_space<vmem>> -> memref<1x128xf32, #tpu.memory_space<vmem>>
      %13 = tpu.memref_squeeze %12 : memref<1x128xf32, #tpu.memory_space<vmem>> -> memref<128xf32, #tpu.memory_space<vmem>>
      %14 = tpu.memref_slice %arg6[%arg7] : memref<32x!tpu.dma_semaphore, #tpu.memory_space<semaphore_mem>> -> memref<1x!tpu.dma_semaphore, #tpu.memory_space<semaphore_mem>>
      %15 = tpu.memref_squeeze %14 : memref<1x!tpu.dma_semaphore, #tpu.memory_space<semaphore_mem>> -> memref<!tpu.dma_semaphore, #tpu.memory_space<semaphore_mem>>
      tpu.wait_dma2 semaphore(%15 : memref<!tpu.dma_semaphore, #tpu.memory_space<semaphore_mem>>) src(%11 : memref<128xf32, #tpu.memory_space<any>>) dst(%13 : memref<128xf32, #tpu.memory_space<vmem>>)
    }
    %c32_i32_5 = arith.constant 32 : i32
    %c0 = arith.constant 0 : index
    %c0_6 = arith.constant 0 : index
    %3 = vector.load %arg5[%c0, %c0_6] : memref<32x128xf32, #tpu.memory_space<vmem>>, vector<32x128xf32>
    %4 = vector.shape_cast %3 : vector<32x128xf32> to vector<2x16x128xf32>
    %c0_7 = arith.constant 0 : index
    %c0_8 = arith.constant 0 : index
    %5 = vector.load %arg2[%c0_7, %c0_8] : memref<16x128xf32, #tpu.memory_space<vmem>>, vector<16x128xf32>
    %6 = vector.shape_cast %5 : vector<16x128xf32> to vector<1x16x128xf32>
    %7 = vector.broadcast %6 : vector<1x16x128xf32> to vector<2x16x128xf32>
    %8 = arith.addf %4, %7 : vector<2x16x128xf32>
    %c0_9 = arith.constant 0 : index
    %c0_10 = arith.constant 0 : index
    %c0_11 = arith.constant 0 : index
    %9 = vector.load %arg4[%c0_9, %c0_10, %c0_11] : memref<2x16x128xf32, #tpu.memory_space<vmem>>, vector<2x16x128xf32>
    tpu.vector_store %arg4[%c0_9, %c0_10, %c0_11], %8 {strides = array<i32>} : memref<2x16x128xf32, #tpu.memory_space<vmem>>, vector<2x16x128xf32>,
    return
  }
  func.func @transform_0(%arg0: i32, %arg1: memref<32xi32, #tpu.memory_space<smem>>) -> (i32, i32) {
    %c0_i32 = arith.constant 0 : i32
    %c0_i32_0 = arith.constant 0 : i32
    %c0_i32_1 = arith.constant 0 : i32
    return %c0_i32, %c0_i32_0 : i32, i32
  }
  func.func @transform_2(%arg0: i32, %arg1: memref<32xi32, #tpu.memory_space<smem>>) -> (i32, i32, i32) {
    %c0_i32 = arith.constant 0 : i32
    %c0_i32_0 = arith.constant 0 : i32
    %c0_i32_1 = arith.constant 0 : i32
    return %arg0, %c0_i32, %c0_i32_0 : i32, i32, i32
  }
}

</mosaic_0001>

<llo_original>
// kernel: tpu_custom_call.1
$region0: #{tpu_custom_call.1}
  #allocation0 [shape = 'u32[]', space=smem, size = 0x4, offset = 0x4, fixed_abs, tag = 'smem constant byte address 0x4 - core index']
  #allocation1 [shape = 'u32[144,128]{1,0:T(1,128)}', space=vmem, size = 0x12000, scoped, tag = 'internal scratch']
  #allocation2 [shape = 'f32[32,128]{1,0:T(8,128)}', space=vmem, size = 0x4000, scoped, tag = 'scratch operand']
  #allocation3 [shape = 's32[32]{0}', space=sflag, size = 0x80, scoped, tag = 'scratch operand']
  #allocation4 [shape = 's32[1]{0}', space=sflag, size = 0x4, scoped, tag = 'scoped memory for tpu_custom_call.1']
  #allocation5 [shape = 'u8[512]{0}', space=smem, size = 0x200, scoped, tag = 'prefetched SMEM operand 0']
  #allocation10 [shape = 's32[]', space=sflag, size = 0x4, offset = 0, fixed_abs, tag = 'sflag constant byte address 0x0 - dummy sync flag']
  #allocation11 [shape = 's32[]', space=sflag, size = 0x4, offset = 0, fixed_abs, tag = 'sflag constant byte address 0x0 - dummy sync flag']
  #allocation12 [shape = 'u32[]', space=smem, size = 0x4, offset = 0x44, fixed_abs, tag = 'smem constant byte address 0x44 - assertion arg 0']
  #allocation13 [shape = 'u32[]', space=smem, size = 0x4, offset = 0x48, fixed_abs, tag = 'smem constant byte address 0x48 - assertion arg 1']
  %s0 = inlined_call_operand.hbm [shape: s32[32], index: 0, kind: input, shape index: {}]
  %s1 = inlined_call_operand.hbm [shape: f32[32,128], index: 1, kind: input, shape index: {}]
  %s2 = inlined_call_operand.hbm [shape: f32[256,128], index: 2, kind: input, shape index: {}]
  %s3 = inlined_call_operand.hbm [shape: f32[2,16,128], index: 3, kind: output, shape index: {}]
  %s4 = sld [smem:[#allocation0]]
  $region36: #{tpu_custom_call.1} parent=0
    _
  %s6 = ssub.s32 1, %s4
  %s7 = scalar_select 0, %s6, %s4
  %9 = dma.hbm_to_smem %s0, 16, [#allocation5], [#allocation4]
  %10 = dma.done [#allocation4], 16
  %11 = sfence
  $region1: #{tpu_custom_call.1} parent=0
    #allocation6 [shape = 'u8[8192]{0}', space=vmem, size = 0x2000, scoped, tag = 'input window, operand 1, single buffered']
    #allocation7 [shape = 's32[1]{0}', space=sflag, size = 0x4, scoped, tag = 'scoped memory for tpu_custom_call.1']
    #allocation8 [shape = 's32[1]{0}', space=sflag, size = 0x4, scoped, tag = 'scoped memory for tpu_custom_call.1']
    #allocation9 [shape = 'u8[16384]{0}', space=vmem, size = 0x4000, scoped, tag = 'output window, operand 0, single buffered']
    %12 = vsyncpa [#allocation7], 0
    %13 = vsyncpa [#allocation8], 0
    // Predicated region
    $region2: #{tpu_custom_call.1} parent=1 // pred_check
      _
    $region3: #{tpu_custom_call.1} parent=1 // pred_check_branch
      %15 = sbr.rel (0) target = $region5
    $region4: #{tpu_custom_call.1} parent=1 // pred_region
      %s17 = ssub.s32 256, 256
      %18 = vsyncadd [#allocation7], %s17
      %s19 = sshll.u32 [#allocation6], 4
      %s20 = int_to_ptr.vmem [resolvable:$true] %s19
      %25 = dma.hbm_to_vmem [thread:$0]  %s1, 256, %s20, [#allocation7], 128, 128, 8
    $region5: #{tpu_custom_call.1} parent=1 // pred_fallthru
      _
    // Predicated region
    $region6: #{tpu_custom_call.1} parent=1 // pred_check
      _
    $region7: #{tpu_custom_call.1} parent=1 // pred_check_branch
      %27 = sbr.rel (0) target = $region9
    $region8: #{tpu_custom_call.1} parent=1 // pred_region
      %28 = dma.done [#allocation7], 256
    $region9: #{tpu_custom_call.1} parent=1 // pred_fallthru
      _
    %s29 = smul.u32 0, 32
    loop: start=0, step=1, limit=32
    $region10: #{tpu_custom_call.1} parent=1 // loop_pre_header
      _
    $region11: #{tpu_custom_call.1} parent=1 // loop_header
      %s31 = sphi 0, %s35
      %p32 = scmp.ge.s32.totalorder %s31, 32
    $region12: #{tpu_custom_call.1} parent=1 // loop_header_branch
      %34 = sbr.rel (%p32) target = $region16
    $region13: #{tpu_custom_call.1} parent=1 // loop_body
      %s36 = sadd.s32 %s29, %s31
      %s37 = sld [smem:[#allocation5 + %s36]]
      %p38 = scmp.gt.s32.totalorder %s37, 0
      %s39 = scalar_select %p38, %s37, 0
      %p40 = scmp.lt.s32.totalorder %s39, 255
      %s41 = scalar_select %p40, %s39, 255
      %s42 = smul.addr %s41, 16
      %s43 = scalar_lea.hbm %s2, %s42
      %s44 = scalar_lea.vmem [#allocation2], %s31
      %s45 = scalar_lea.sflag [#allocation3], %s31
      // Predicated region
      $region17: #{tpu_custom_call.1} parent=13 // pred_check
        _
      $region18: #{tpu_custom_call.1} parent=13 // pred_check_branch
        %47 = sbr.rel target = $region20
      $region19: #{tpu_custom_call.1} parent=13 // pred_region
        %48 = sst [smem:[#allocation12]] [#allocation11]
        %49 = sst [smem:[#allocation13]] [#allocation10]
      $region20: #{tpu_custom_call.1} parent=13 // pred_fallthru
        _
      %51 = shalt.err (0)
      %s53 = sshll.u32 %s44, 4
      %s54 = int_to_ptr.vmem [resolvable:$true] %s53
      %56 = dma.hbm_to_vmem [thread:$0]  %s43, 16, %s54, %s45
    $region14: #{tpu_custom_call.1} parent=1 // loop_footer
      %s35 = sadd.s32 1, %s31
    $region15: #{tpu_custom_call.1} parent=1 // loop_footer_branch
      %30 = sbr.rel target = $region11
    $region16: #{tpu_custom_call.1} parent=1 // loop_exit
      _
    loop: start=0, step=1, limit=32
    $region21: #{tpu_custom_call.1} parent=1 // loop_pre_header
      _
    $region22: #{tpu_custom_call.1} parent=1 // loop_header
      %s58 = sphi 0, %s62
      %p59 = scmp.ge.s32.totalorder %s58, 32
    $region23: #{tpu_custom_call.1} parent=1 // loop_header_branch
      %61 = sbr.rel (%p59) target = $region27
    $region24: #{tpu_custom_call.1} parent=1 // loop_body
      %s63 = scalar_lea.sflag [#allocation3], %s58
      %65 = dma.done %s63, 16
    $region25: #{tpu_custom_call.1} parent=1 // loop_footer
      %s62 = sadd.s32 1, %s58
    $region26: #{tpu_custom_call.1} parent=1 // loop_footer_branch
      %57 = sbr.rel target = $region22
    $region27: #{tpu_custom_call.1} parent=1 // loop_exit
      _
    %v66 = vld [vmem:[#allocation2] sm:$0xff]
    %v67 = vld [vmem:[#allocation2 + $0x8] sm:$0xff]
    %v68 = vld [vmem:[#allocation2 + $0x10] sm:$0xff]
    %v69 = vld [vmem:[#allocation2 + $0x18] sm:$0xff]
    %v70 = vld [vmem:[#allocation6] sm:$0xff]
    %v71 = vld [vmem:[#allocation6 + $0x8] sm:$0xff]
    %v72 = vadd.f32 %v66, %v70
    %v73 = vadd.f32 %v67, %v71
    %v74 = vadd.f32 %v68, %v70
    %v75 = vadd.f32 %v69, %v71
    %76 = vst [vmem:[#allocation9] sm:$0xff] %v72
    %77 = vst [vmem:[#allocation9 + $0x8] sm:$0xff] %v73
    %78 = vst [vmem:[#allocation9 + $0x10] sm:$0xff] %v74
    %79 = vst [vmem:[#allocation9 + $0x18] sm:$0xff] %v75
    // Predicated region
    $region28: #{tpu_custom_call.1} parent=1 // pred_check
      _
    $region29: #{tpu_custom_call.1} parent=1 // pred_check_branch
      %81 = sbr.rel (0) target = $region31
    $region30: #{tpu_custom_call.1} parent=1 // pred_region
      %s83 = ssub.s32 512, 512
      %84 = vsyncadd [#allocation8], %s83
      %s85 = sshll.u32 [#allocation9], 4
      %s86 = int_to_ptr.vmem [resolvable:$true] %s85
      %91 = dma.vmem_to_hbm [thread:$0]  %s86, 512, %s3, [#allocation8], 128, 128, 8
    $region31: #{tpu_custom_call.1} parent=1 // pred_fallthru
      _
    // Predicated region
    $region32: #{tpu_custom_call.1} parent=1 // pred_check
      _
    $region33: #{tpu_custom_call.1} parent=1 // pred_check_branch
      %93 = sbr.rel (0) target = $region35
    $region34: #{tpu_custom_call.1} parent=1 // pred_region
      %94 = dma.done [#allocation8], 512
    $region35: #{tpu_custom_call.1} parent=1 // pred_fallthru
      _
    %95 = vsyncpa [#allocation7], 1
    %96 = vsyncpa [#allocation8], 1
  %97 = vsyncmov [#allocation3]
  %s98 = vpop.sfrf %97
  %p99 = scmp.eq.s32.totalorder %s98, 0
  %p100 = pneg %p99
  %102 = shalt.err (%p100)
  %s103 = scalar_lea.sflag [#allocation3], 1
  %104 = vsyncmov %s103
  %s105 = vpop.sfrf %104
  %p106 = scmp.eq.s32.totalorder %s105, 0
  %p107 = pneg %p106
  %109 = shalt.err (%p107)
  %s110 = scalar_lea.sflag [#allocation3], 2
  %111 = vsyncmov %s110
  %s112 = vpop.sfrf %111
  %p113 = scmp.eq.s32.totalorder %s112, 0
  %p114 = pneg %p113
  %116 = shalt.err (%p114)
  %s117 = scalar_lea.sflag [#allocation3], 3
  %118 = vsyncmov %s117
  %s119 = vpop.sfrf %118
  %p120 = scmp.eq.s32.totalorder %s119, 0
  %p121 = pneg %p120
  %123 = shalt.err (%p121)
  %s124 = scalar_lea.sflag [#allocation3], 4
  %125 = vsyncmov %s124
  %s126 = vpop.sfrf %125
  %p127 = scmp.eq.s32.totalorder %s126, 0
  %p128 = pneg %p127
  %130 = shalt.err (%p128)
  %s131 = scalar_lea.sflag [#allocation3], 5
  %132 = vsyncmov %s131
  %s133 = vpop.sfrf %132
  %p134 = scmp.eq.s32.totalorder %s133, 0
  %p135 = pneg %p134
  %137 = shalt.err (%p135)
  %s138 = scalar_lea.sflag [#allocation3], 6
  %139 = vsyncmov %s138
  %s140 = vpop.sfrf %139
  %p141 = scmp.eq.s32.totalorder %s140, 0
  %p142 = pneg %p141
  %144 = shalt.err (%p142)
  %s145 = scalar_lea.sflag [#allocation3], 7
  %146 = vsyncmov %s145
  %s147 = vpop.sfrf %146
  %p148 = scmp.eq.s32.totalorder %s147, 0
  %p149 = pneg %p148
  %151 = shalt.err (%p149)
  %s152 = scalar_lea.sflag [#allocation3], 8
  %153 = vsyncmov %s152
  %s154 = vpop.sfrf %153
  %p155 = scmp.eq.s32.totalorder %s154, 0
  %p156 = pneg %p155
  %158 = shalt.err (%p156)
  %s159 = scalar_lea.sflag [#allocation3], 9
  %160 = vsyncmov %s159
  %s161 = vpop.sfrf %160
  %p162 = scmp.eq.s32.totalorder %s161, 0
  %p163 = pneg %p162
  %165 = shalt.err (%p163)
  %s166 = scalar_lea.sflag [#allocation3], 10
  %167 = vsyncmov %s166
  %s168 = vpop.sfrf %167
  %p169 = scmp.eq.s32.totalorder %s168, 0
  %p170 = pneg %p169
  %172 = shalt.err (%p170)
  %s173 = scalar_lea.sflag [#allocation3], 11
  %174 = vsyncmov %s173
  %s175 = vpop.sfrf %174
  %p176 = scmp.eq.s32.totalorder %s175, 0
  %p177 = pneg %p176
  %179 = shalt.err (%p177)
  %s180 = scalar_lea.sflag [#allocation3], 12
  %181 = vsyncmov %s180
  %s182 = vpop.sfrf %181
  %p183 = scmp.eq.s32.totalorder %s182, 0
  %p184 = pneg %p183
  %186 = shalt.err (%p184)
  %s187 = scalar_lea.sflag [#allocation3], 13
  %188 = vsyncmov %s187
  %s189 = vpop.sfrf %188
  %p190 = scmp.eq.s32.totalorder %s189, 0
  %p191 = pneg %p190
  %193 = shalt.err (%p191)
  %s194 = scalar_lea.sflag [#allocation3], 14
  %195 = vsyncmov %s194
  %s196 = vpop.sfrf %195
  %p197 = scmp.eq.s32.totalorder %s196, 0
  %p198 = pneg %p197
  %200 = shalt.err (%p198)
  %s201 = scalar_lea.sflag [#allocation3], 15
  %202 = vsyncmov %s201
  %s203 = vpop.sfrf %202
  %p204 = scmp.eq.s32.totalorder %s203, 0
  %p205 = pneg %p204
  %207 = shalt.err (%p205)
  %s208 = scalar_lea.sflag [#allocation3], 16
  %209 = vsyncmov %s208
  %s210 = vpop.sfrf %209
  %p211 = scmp.eq.s32.totalorder %s210, 0
  %p212 = pneg %p211
  %214 = shalt.err (%p212)
  %s215 = scalar_lea.sflag [#allocation3], 17
  %216 = vsyncmov %s215
  %s217 = vpop.sfrf %216
  %p218 = scmp.eq.s32.totalorder %s217, 0
  %p219 = pneg %p218
  %221 = shalt.err (%p219)
  %s222 = scalar_lea.sflag [#allocation3], 18
  %223 = vsyncmov %s222
  %s224 = vpop.sfrf %223
  %p225 = scmp.eq.s32.totalorder %s224, 0
  %p226 = pneg %p225
  %228 = shalt.err (%p226)
  %s229 = scalar_lea.sflag [#allocation3], 19
  %230 = vsyncmov %s229
  %s231 = vpop.sfrf %230
  %p232 = scmp.eq.s32.totalorder %s231, 0
  %p233 = pneg %p232
  %235 = shalt.err (%p233)
  %s236 = scalar_lea.sflag [#allocation3], 20
  %237 = vsyncmov %s236
  %s238 = vpop.sfrf %237
  %p239 = scmp.eq.s32.totalorder %s238, 0
  %p240 = pneg %p239
  %242 = shalt.err (%p240)
  %s243 = scalar_lea.sflag [#allocation3], 21
  %244 = vsyncmov %s243
  %s245 = vpop.sfrf %244
  %p246 = scmp.eq.s32.totalorder %s245, 0
  %p247 = pneg %p246
  %249 = shalt.err (%p247)
  %s250 = scalar_lea.sflag [#allocation3], 22
  %251 = vsyncmov %s250
  %s252 = vpop.sfrf %251
  %p253 = scmp.eq.s32.totalorder %s252, 0
  %p254 = pneg %p253
  %256 = shalt.err (%p254)
  %s257 = scalar_lea.sflag [#allocation3], 23
  %258 = vsyncmov %s257
  %s259 = vpop.sfrf %258
  %p260 = scmp.eq.s32.totalorder %s259, 0
  %p261 = pneg %p260
  %263 = shalt.err (%p261)
  %s264 = scalar_lea.sflag [#allocation3], 24
  %265 = vsyncmov %s264
  %s266 = vpop.sfrf %265
  %p267 = scmp.eq.s32.totalorder %s266, 0
  %p268 = pneg %p267
  %270 = shalt.err (%p268)
  %s271 = scalar_lea.sflag [#allocation3], 25
  %272 = vsyncmov %s271
  %s273 = vpop.sfrf %272
  %p274 = scmp.eq.s32.totalorder %s273, 0
  %p275 = pneg %p274
  %277 = shalt.err (%p275)
  %s278 = scalar_lea.sflag [#allocation3], 26
  %279 = vsyncmov %s278
  %s280 = vpop.sfrf %279
  %p281 = scmp.eq.s32.totalorder %s280, 0
  %p282 = pneg %p281
  %284 = shalt.err (%p282)
  %s285 = scalar_lea.sflag [#allocation3], 27
  %286 = vsyncmov %s285
  %s287 = vpop.sfrf %286
  %p288 = scmp.eq.s32.totalorder %s287, 0
  %p289 = pneg %p288
  %291 = shalt.err (%p289)
  %s292 = scalar_lea.sflag [#allocation3], 28
  %293 = vsyncmov %s292
  %s294 = vpop.sfrf %293
  %p295 = scmp.eq.s32.totalorder %s294, 0
  %p296 = pneg %p295
  %298 = shalt.err (%p296)
  %s299 = scalar_lea.sflag [#allocation3], 29
  %300 = vsyncmov %s299
  %s301 = vpop.sfrf %300
  %p302 = scmp.eq.s32.totalorder %s301, 0
  %p303 = pneg %p302
  %305 = shalt.err (%p303)
  %s306 = scalar_lea.sflag [#allocation3], 30
  %307 = vsyncmov %s306
  %s308 = vpop.sfrf %307
  %p309 = scmp.eq.s32.totalorder %s308, 0
  %p310 = pneg %p309
  %312 = shalt.err (%p310)
  %s313 = scalar_lea.sflag [#allocation3], 31
  %314 = vsyncmov %s313
  %s315 = vpop.sfrf %314
  %p316 = scmp.eq.s32.totalorder %s315, 0
  %p317 = pneg %p316
  %319 = shalt.err (%p317)

</llo_original>
